<compile_context>
chip_gen: v5e
topology: v5e:2x2
jax: 0.10.0
libtpu: 0.0.40
codegen_flags: <defaults>
</compile_context>

<pallas_src>
import math
import functools

import jax
import jax.numpy as jnp
from jax.experimental import pallas as pl
from jax.experimental.pallas import tpu as pltpu


def make_positional_encoding_table(d_model, max_len=5000):
    """Sinusoidal positional-encoding buffer, identical to the PyTorch module."""
    position = jnp.arange(max_len, dtype=jnp.float32)[:, None]              # [max_len, 1]
    div_term = jnp.exp(
        jnp.arange(0, d_model, 2, dtype=jnp.float32) * (-math.log(10000.0) / d_model)
    )                                                                        # [D/2]
    pe = jnp.zeros((max_len, d_model), dtype=jnp.float32)
    pe = pe.at[:, 0::2].set(jnp.sin(position * div_term))
    pe = pe.at[:, 1::2].set(jnp.cos(position * div_term))
    return pe                                                                # [max_len, D] f32


# ----------------------------- kernels --------------------------------------


def _pe_add_kernel(x_ref, pe_ref, o_ref):
    # x_ref/pe_ref/o_ref: (TS, B*D) lane-dense tiles. pe is kept f32; the add
    # promotes and we cast only the output (closer to PyTorch semantics).
    o_ref[...] = (x_ref[...] + pe_ref[...]).astype(o_ref.dtype)


def _pe_add_dropout_kernel(seed_ref, x_ref, pe_ref, o_ref, *, dropout_p):
    # Per-tile seed so tiles don't repeat the same dropout mask.
    pltpu.prng_seed(seed_ref[0] + pl.program_id(0))
    y = x_ref[...] + pe_ref[...]                                  # f32
    bits = pltpu.bitcast(pltpu.prng_random_bits(y.shape), jnp.uint32)
    threshold = jnp.uint32(int(dropout_p * 4294967296.0))         # p * 2**32
    keep = bits >= threshold                                      # P(keep) = 1 - p
    y = jnp.where(keep, y * (1.0 / (1.0 - dropout_p)), 0.0)
    o_ref[...] = y.astype(o_ref.dtype)


# ----------------------------- wrapper ---------------------------------------


def _tile_rows(S, row_bytes, target_bytes=2 * 1024 * 1024):
    """Rows per tile: ~target_bytes per x-tile, multiple of 8, capped at S."""
    ts = max(8, (target_bytes // max(int(row_bytes), 1)) // 8 * 8)
    if ts >= S:
        ts = S            # whole array fits in one small block
    return ts


def positional_encoding_forward(x, pe, *, dropout_p=0.1, training=False, seed=0):
    """x: [S, B, D], pe: [max_len, D] (float32) -> [S, B, D]."""
    S, B, D = x.shape
    BD = B * D

    # Lane-dense 2D slab: last dim B*D -> unmasked full-lane stores.
    x2 = x.reshape(S, BD)
    # Pre-broadcast pe over batch once in JAX (tiny vs. x) and keep it f32.
    pe2 = jnp.broadcast_to(pe[:S, :].astype(jnp.float32)[:, None, :], (S, B, D))
    pe2 = pe2.reshape(S, BD)

    ts = _tile_rows(S, BD * jnp.dtype(x.dtype).itemsize)
    nblk = pl.cdiv(S, ts)

    compiler_params = pltpu.CompilerParams(
        dimension_semantics=("parallel",),          # megacore sharding on v7x
        vmem_limit_bytes=32 * 1024 * 1024,          # safe on v5e/v6e/v7x
    )
    out_shape = jax.ShapeDtypeStruct((S, BD), x.dtype)

    if training and dropout_p > 0.0:
        kernel = functools.partial(_pe_add_dropout_kernel, dropout_p=float(dropout_p))
        out2 = pl.pallas_call(
            kernel,
            out_shape=out_shape,
            grid_spec=pltpu.PrefetchScalarGridSpec(
                num_scalar_prefetch=1,              # seed -> SMEM
                grid=(nblk,),
                in_specs=[
                    pl.BlockSpec((ts, BD), lambda i, seed: (i, 0)),
                    pl.BlockSpec((ts, BD), lambda i, seed: (i, 0)),
                ],
                out_specs=pl.BlockSpec((ts, BD), lambda i, seed: (i, 0)),
            ),
            compiler_params=compiler_params,
        )(jnp.array([seed], dtype=jnp.int32), x2, pe2)
    else:
        # Eval path: no scalar prefetch, no seed plumbing.
        out2 = pl.pallas_call(
            _pe_add_kernel,
            out_shape=out_shape,
            grid=(nblk,),
            in_specs=[
                pl.BlockSpec((ts, BD), lambda i: (i, 0)),
                pl.BlockSpec((ts, BD), lambda i: (i, 0)),
            ],
            out_specs=pl.BlockSpec((ts, BD), lambda i: (i, 0)),
            compiler_params=compiler_params,
        )(x2, pe2)

    return out2.reshape(S, B, D)


# ------------------------------- demo ----------------------------------------


if __name__ == "__main__":
    # Small shapes consistent with forward(): [seq_len, batch, d_model]
    seq_len, batch, d_model = 8, 2, 32
    max_len = 64

    key = jax.random.PRNGKey(0)
    x = jax.random.normal(key, (seq_len, batch, d_model), dtype=jnp.float32)

    pe = make_positional_encoding_table(d_model, max_len=max_len)

    # Eval-mode forward (dropout = identity) — deterministic, checkable.
    out = positional_encoding_forward(x, pe, dropout_p=0.1, training=False)
    out = jax.block_until_ready(out)

    # Reference in plain JAX: x + pe[:S][:, None, :]
    ref = x + pe[:seq_len, :][:, None, :]
    assert out.shape == (seq_len, batch, d_model)
    assert jnp.allclose(out, ref, atol=1e-6, rtol=1e-6), "mismatch vs reference"

    print("KERNEL_OK")
</pallas_src>

<mosaic_0001>
module attributes {stable_mosaic.version = 11 : i64} {
  func.func @_pe_add_kernel(%arg0: i32, %arg1: memref<8x64xf32, #tpu.memory_space<vmem>>, %arg2: memref<8x64xf32, #tpu.memory_space<vmem>>, %arg3: memref<8x64xf32, #tpu.memory_space<vmem>>) attributes {dimension_semantics = [#tpu.dimension_semantics<parallel>], iteration_bounds = array<i64: 1>, scalar_prefetch = 0 : i64, scratch_operands = 0 : i64, tpu.core_type = #tpu.core_type<tc>, window_params = [{transform_indices = @transform_0, window_bounds = array<i64: 8, 64>}, {transform_indices = @transform_1, window_bounds = array<i64: 8, 64>}, {transform_indices = @transform_2, window_bounds = array<i64: 8, 64>}]} {
    %c0 = arith.constant 0 : index
    %c0_0 = arith.constant 0 : index
    %0 = vector.load %arg1[%c0, %c0_0] : memref<8x64xf32, #tpu.memory_space<vmem>>, vector<8x64xf32>
    %c0_1 = arith.constant 0 : index
    %c0_2 = arith.constant 0 : index
    %1 = vector.load %arg2[%c0_1, %c0_2] : memref<8x64xf32, #tpu.memory_space<vmem>>, vector<8x64xf32>
    %2 = arith.addf %0, %1 : vector<8x64xf32>
    %c0_3 = arith.constant 0 : index
    %c0_4 = arith.constant 0 : index
    %3 = vector.load %arg3[%c0_3, %c0_4] : memref<8x64xf32, #tpu.memory_space<vmem>>, vector<8x64xf32>
    tpu.vector_store %arg3[%c0_3, %c0_4], %2 {strides = array<i32>} : memref<8x64xf32, #tpu.memory_space<vmem>>, vector<8x64xf32>,
    return
  }
  func.func @transform_0(%arg0: i32) -> (i32, i32) {
    %c0_i32 = arith.constant 0 : i32
    %c0_i32_0 = arith.constant 0 : i32
    return %arg0, %c0_i32 : i32, i32
  }
  func.func @transform_1(%arg0: i32) -> (i32, i32) {
    %c0_i32 = arith.constant 0 : i32
    %c0_i32_0 = arith.constant 0 : i32
    return %arg0, %c0_i32 : i32, i32
  }
  func.func @transform_2(%arg0: i32) -> (i32, i32) {
    %c0_i32 = arith.constant 0 : i32
    %c0_i32_0 = arith.constant 0 : i32
    return %arg0, %c0_i32 : i32, i32
  }
}

</mosaic_0001>

<llo_original>
// kernel: tpu_custom_call.1
$region0: #{tpu_custom_call.1}
  #allocation0 [shape = 'u32[]', space=smem, size = 0x4, offset = 0x4, fixed_abs, tag = 'smem constant byte address 0x4 - core index']
  #allocation1 [shape = 'u32[72,128]{1,0:T(1,128)}', space=vmem, size = 0x9000, scoped, tag = 'internal scratch']
  %s0 = inlined_call_operand.hbm [shape: f32[8,64], index: 0, kind: input, shape index: {}]
  %s1 = inlined_call_operand.hbm [shape: f32[8,64], index: 1, kind: input, shape index: {}]
  %s2 = inlined_call_operand.hbm [shape: f32[8,64], index: 2, kind: output, shape index: {}]
  %s3 = sld [smem:[#allocation0]]
  $region26: #{tpu_custom_call.1} parent=0
    _
  %s5 = ssub.s32 1, %s3
  %s6 = scalar_select 0, %s5, %s3
  $region1: #{tpu_custom_call.1} parent=0
    #allocation2 [shape = 'u8[4096]{0}', space=vmem, size = 0x1000, scoped, tag = 'input window, operand 0, single buffered']
    #allocation3 [shape = 's32[1]{0}', space=sflag, size = 0x4, scoped, tag = 'scoped memory for tpu_custom_call.1']
    #allocation4 [shape = 's32[1]{0}', space=sflag, size = 0x4, scoped, tag = 'scoped memory for tpu_custom_call.1']
    #allocation5 [shape = 'u8[4096]{0}', space=vmem, size = 0x1000, scoped, tag = 'input window, operand 1, single buffered']
    #allocation6 [shape = 's32[1]{0}', space=sflag, size = 0x4, scoped, tag = 'scoped memory for tpu_custom_call.1']
    #allocation7 [shape = 'u8[4096]{0}', space=vmem, size = 0x1000, scoped, tag = 'output window, operand 0, single buffered']
    %7 = vsyncpa [#allocation3], 0
    %8 = vsyncpa [#allocation6], 0
    %9 = vsyncpa [#allocation4], 0
    // Predicated region
    $region2: #{tpu_custom_call.1} parent=1 // pred_check
      _
    $region3: #{tpu_custom_call.1} parent=1 // pred_check_branch
      %11 = sbr.rel (0) target = $region5
    $region4: #{tpu_custom_call.1} parent=1 // pred_region
      %13 = vsyncadd [#allocation3], 0
      %s15 = sshll.u32 %s0, 4
      %s16 = int_to_ptr.hbm [resolvable:$true] %s15
      %s17 = sshll.u32 [#allocation2], 4
      %s18 = int_to_ptr.vmem [resolvable:$true] %s17
      %20 = dma.hbm_to_vmem [thread:$0]  %s16, 128, %s18, [#allocation3]
    $region5: #{tpu_custom_call.1} parent=1 // pred_fallthru
      _
    // Predicated region
    $region6: #{tpu_custom_call.1} parent=1 // pred_check
      _
    $region7: #{tpu_custom_call.1} parent=1 // pred_check_branch
      %22 = sbr.rel (0) target = $region9
    $region8: #{tpu_custom_call.1} parent=1 // pred_region
      %24 = vsyncadd [#allocation6], 0
      %s26 = sshll.u32 %s1, 4
      %s27 = int_to_ptr.hbm [resolvable:$true] %s26
      %s28 = sshll.u32 [#allocation5], 4
      %s29 = int_to_ptr.vmem [resolvable:$true] %s28
      %31 = dma.hbm_to_vmem [thread:$0]  %s27, 128, %s29, [#allocation6]
    $region9: #{tpu_custom_call.1} parent=1 // pred_fallthru
      _
    // Predicated region
    $region10: #{tpu_custom_call.1} parent=1 // pred_check
      _
    $region11: #{tpu_custom_call.1} parent=1 // pred_check_branch
      %33 = sbr.rel (0) target = $region13
    $region12: #{tpu_custom_call.1} parent=1 // pred_region
      %35 = dma.done [#allocation3], 128
    $region13: #{tpu_custom_call.1} parent=1 // pred_fallthru
      _
    // Predicated region
    $region14: #{tpu_custom_call.1} parent=1 // pred_check
      _
    $region15: #{tpu_custom_call.1} parent=1 // pred_check_branch
      %37 = sbr.rel (0) target = $region17
    $region16: #{tpu_custom_call.1} parent=1 // pred_region
      %39 = dma.done [#allocation6], 128
    $region17: #{tpu_custom_call.1} parent=1 // pred_fallthru
      _
    %v40 = vld [vmem:[#allocation2] sm:$0xff]
    %v41 = vld [vmem:[#allocation5] sm:$0xff]
    %v42 = vadd.f32 %v40, %v41
    %vm43 = vcmask 523264
    %44 = vst.msk [vmem:[#allocation7] sm:$0xff] %vm43, %v42
    // Predicated region
    $region18: #{tpu_custom_call.1} parent=1 // pred_check
      _
    $region19: #{tpu_custom_call.1} parent=1 // pred_check_branch
      %46 = sbr.rel (0) target = $region21
    $region20: #{tpu_custom_call.1} parent=1 // pred_region
      %48 = vsyncadd [#allocation4], 0
      %s50 = sshll.u32 [#allocation7], 4
      %s51 = int_to_ptr.vmem [resolvable:$true] %s50
      %s52 = sshll.u32 %s2, 4
      %s53 = int_to_ptr.hbm [resolvable:$true] %s52
      %55 = dma.vmem_to_hbm [thread:$0]  %s51, 128, %s53, [#allocation4]
    $region21: #{tpu_custom_call.1} parent=1 // pred_fallthru
      _
    // Predicated region
    $region22: #{tpu_custom_call.1} parent=1 // pred_check
      _
    $region23: #{tpu_custom_call.1} parent=1 // pred_check_branch
      %57 = sbr.rel (0) target = $region25
    $region24: #{tpu_custom_call.1} parent=1 // pred_region
      %59 = dma.done [#allocation4], 128
    $region25: #{tpu_custom_call.1} parent=1 // pred_fallthru
      _
    %60 = vsyncpa [#allocation3], 1
    %61 = vsyncpa [#allocation6], 1
    %62 = vsyncpa [#allocation4], 1

</llo_original>
